<compile_context>
chip_gen: v7x
topology: tpu7x:2x2x1
jax: 0.10.0
libtpu: 0.0.40
codegen_flags: <defaults>
</compile_context>

<pallas_src>
import functools

import jax
import jax.numpy as jnp
from jax.experimental import pallas as pl
from jax.experimental.pallas import tpu as pltpu

BN_EPS = 1e-5


def _round_up(x, m):
    return ((x + m - 1) // m) * m


def _cdiv(a, b):
    return -(-a // b)


def _vmem_budget_bytes():
    """Per-generation VMEM budget: ~half physical (64 MiB v5e/v6e, 32 MiB v7x)."""
    try:
        cap = int(pltpu.get_tpu_info().vmem_capacity_bytes)
    except Exception:  # conservative fallback if the query is unavailable
        cap = 64 * 1024 * 1024
    return max(32 * 1024 * 1024, min(cap // 2, 96 * 1024 * 1024))


def _pick_tile_l(L_out, CK_pad, C_outp, budget):
    """Largest 128-multiple lane tile whose double-buffered tiles fit the budget."""
    per_lane = max(4 * CK_pad + 4 * C_outp,   # phase 1: patches bf16 + y bf16, 2-buffered
                   12 * C_outp)               # phase 2: y bf16 in + f32 out, 2-buffered
    weight_resident = 4 * C_outp * CK_pad     # double-buffered bf16 weight
    avail = (budget * 3) // 4 - weight_resident
    tile = 128
    if avail > 128 * per_lane:
        tile = (avail // per_lane) // 128 * 128
    tile = max(128, min(tile, 8192))
    return min(tile, _round_up(L_out, 128))


def _conv_stats_kernel(w_ref, patches_ref, y_ref, sums_ref, acc_ref):
    """Phase 1: conv matmul (NCL layout) + per-core-group sum / sumsq stats."""
    n = pl.program_id(1)
    t = pl.program_id(2)

    @pl.when((n == 0) & (t == 0))
    def _():
        acc_ref[...] = jnp.zeros_like(acc_ref)

    # Conv1d on the MXU, bf16 inputs / f32 accumulation:
    #   y[c_out, l] = sum_ck W[c_out, ck] * patches[ck, l]
    y = jnp.dot(w_ref[...], patches_ref[0], preferred_element_type=jnp.float32)
    y_ref[0] = y.astype(y_ref.dtype)          # bf16 intermediate (halves HBM traffic)

    # Single combined (C, 2) accumulator update: [:, 0] = sum, [:, 1] = sumsq.
    stats = jnp.concatenate(
        [jnp.sum(y, axis=1, keepdims=True),
         jnp.sum(y * y, axis=1, keepdims=True)], axis=1)
    acc_ref[...] += stats

    @pl.when((n == pl.num_programs(1) - 1) & (t == pl.num_programs(2) - 1))
    def _():
        sums_ref[0] = acc_ref[...]


def _bn_silu_kernel(y_ref, scale_ref, shift_ref, out_ref):
    """Phase 2: folded BatchNorm affine + SiLU, already in NCL layout."""
    z = y_ref[0].astype(jnp.float32) * scale_ref[...] + shift_ref[...]
    # SiLU: z * sigmoid(z); the reciprocal goes to the (otherwise idle) EUP slot.
    out_ref[0] = z * pl.reciprocal(1.0 + jnp.exp(-z), approx=True)


@functools.partial(jax.jit, static_argnames=("stride", "tile_l", "core_groups"))
def cbs_forward(x, weight, gamma, beta, *, stride, tile_l=None, core_groups=2):
    """x: (N, C_in, L) f32, weight: (C_out, C_in, K) f32 (no bias).

    Returns (N, C_out, L_out) f32, matching torch Conv1d -> BatchNorm1d
    (training-mode batch statistics, eps=1e-5) -> SiLU.
    """
    N, C_in, L = x.shape
    C_out, _, K = weight.shape
    pad = (K - 1) // 2
    L_out = (L + 2 * pad - K) // stride + 1

    CK = C_in * K
    CK_pad = _round_up(CK, 16)      # bf16 sublane packing on the MXU contraction dim
    C_outp = _round_up(C_out, 16)   # sublane dim of bf16 y / f32 stats & scale

    budget = _vmem_budget_bytes()
    if tile_l is None:
        tile_l = _pick_tile_l(L_out, CK_pad, C_outp, budget)
    else:
        tile_l = min(max(128, _round_up(int(tile_l), 128)), _round_up(L_out, 128))

    n_lt = _cdiv(L_out, tile_l)                    # L_out tiles actually needed
    G = max(1, min(int(core_groups), n_lt))        # per-TensorCore stat groups (v7x)
    ltpg = _cdiv(n_lt, G)                          # L tiles per group
    n_lt_pad = G * ltpg
    L_out_pad = n_lt_pad * tile_l

    # ---------- glue: im2col in NCL-friendly (N, C_in*K, L_out_pad) layout ----------
    x_need = (L_out_pad - 1) * stride + K
    pad_right = max(0, x_need - (L + 2 * pad))
    x_pad = jnp.pad(x, ((0, 0), (0, 0), (pad, pad + pad_right)))
    pos = jnp.arange(K)[:, None] + jnp.arange(L_out_pad)[None, :] * stride  # (K, L_out_pad)
    patches = x_pad[:, :, pos].reshape(N, CK, L_out_pad).astype(jnp.bfloat16)
    if CK_pad != CK:
        patches = jnp.pad(patches, ((0, 0), (0, CK_pad - CK), (0, 0)))

    w_p = jnp.zeros((C_outp, CK_pad), jnp.bfloat16)
    w_p = w_p.at[:C_out, :CK].set(weight.reshape(C_out, CK).astype(jnp.bfloat16))

    # ---------- phase 1: conv matmul + per-group sum / sumsq ----------
    # TODO(synk): for very wide layers (CK_pad*C_outp bf16 comparable to the VMEM
    # budget) add a CK-reduction grid axis / pl.Buffered(1) weight instead of
    # relying on tile_l shrinking.
    y_full, sums = pl.pallas_call(
        _conv_stats_kernel,
        out_shape=(
            jax.ShapeDtypeStruct((N, C_outp, L_out_pad), jnp.bfloat16),
            jax.ShapeDtypeStruct((G, C_outp, 2), jnp.float32),
        ),
        grid=(G, N, ltpg),
        in_specs=[
            pl.BlockSpec((C_outp, CK_pad), lambda g, n, t: (0, 0)),
            pl.BlockSpec((1, CK_pad, tile_l), lambda g, n, t: (n, 0, g * ltpg + t)),
        ],
        out_specs=(
            pl.BlockSpec((1, C_outp, tile_l), lambda g, n, t: (n, 0, g * ltpg + t)),
            pl.BlockSpec((1, C_outp, 2), lambda g, n, t: (g, 0, 0)),
        ),
        scratch_shapes=[pltpu.VMEM((C_outp, 2), jnp.float32)],
        compiler_params=pltpu.CompilerParams(
            dimension_semantics=("parallel", "arbitrary", "arbitrary"),
            vmem_limit_bytes=budget,
        ),
    )(w_p, patches)

    # ---------- glue: fold train-mode BatchNorm into a per-channel affine ----------
    total = jnp.sum(sums, axis=0)                       # reduce per-group partials
    count = jnp.float32(N * L_out)                      # padded positions contribute zero
    mean = total[:, 0:1] / count
    # Single-pass variance (clamped); adequate in f32 for conv activations.
    var = jnp.maximum(total[:, 1:2] / count - mean * mean, 0.0)
    inv_std = jax.lax.rsqrt(var + BN_EPS)
    gamma_p = jnp.zeros((C_outp, 1), jnp.float32).at[:C_out, 0].set(gamma)
    beta_p = jnp.zeros((C_outp, 1), jnp.float32).at[:C_out, 0].set(beta)
    scale = gamma_p * inv_std                           # (C_outp, 1)
    shift = beta_p - mean * scale                       # (C_outp, 1)

    # ---------- phase 2: normalize + SiLU, no transpose needed ----------
    out_full = pl.pallas_call(
        _bn_silu_kernel,
        out_shape=jax.ShapeDtypeStruct((N, C_outp, L_out_pad), jnp.float32),
        grid=(N, n_lt_pad),
        in_specs=[
            pl.BlockSpec((1, C_outp, tile_l), lambda n, t: (n, 0, t)),
            pl.BlockSpec((C_outp, 1), lambda n, t: (0, 0)),
            pl.BlockSpec((C_outp, 1), lambda n, t: (0, 0)),
        ],
        out_specs=pl.BlockSpec((1, C_outp, tile_l), lambda n, t: (n, 0, t)),
        compiler_params=pltpu.CompilerParams(
            dimension_semantics=("parallel", "parallel"),
            vmem_limit_bytes=budget,
        ),
    )(y_full, scale, shift)

    # Only a slice remains (NCL layout was produced in-kernel).
    return out_full[:, :C_out, :L_out]


def cbs_reference(x, weight, gamma, beta, *, stride):
    """Pure-JAX f32 reference of the torch forward (train-mode BN)."""
    pad = (weight.shape[2] - 1) // 2
    y = jax.lax.conv_general_dilated(
        x, weight, window_strides=(stride,), padding=[(pad, pad)],
        dimension_numbers=("NCH", "OIH", "NCH"))
    mean = y.mean(axis=(0, 2), keepdims=True)
    var = ((y - mean) ** 2).mean(axis=(0, 2), keepdims=True)
    z = (y - mean) / jnp.sqrt(var + BN_EPS)
    z = z * gamma[None, :, None] + beta[None, :, None]
    return z * jax.nn.sigmoid(z)


def _check(name, x, weight, gamma, beta, *, stride, tile_l=None):
    out = jax.block_until_ready(
        cbs_forward(x, weight, gamma, beta, stride=stride, tile_l=tile_l))
    N, _, L = x.shape
    C_out, _, K = weight.shape
    pad = (K - 1) // 2
    L_out = (L + 2 * pad - K) // stride + 1
    assert out.shape == (N, C_out, L_out), (name, out.shape)
    ref = cbs_reference(x, weight, gamma, beta, stride=stride)
    err = float(jnp.max(jnp.abs(out - ref)))
    # Tolerance covers bf16 MXU inputs + bf16 conv intermediate (BN re-normalizes
    # with f32 stats) + the approx-EUP reciprocal inside the sigmoid.
    assert jnp.allclose(out, ref, atol=3e-2, rtol=3e-2), (name, err)


if __name__ == "__main__":
    key = jax.random.PRNGKey(0)
    k1, k2, k3, k4, k5, k6, k7, k8 = jax.random.split(key, 8)

    # Config 1: stride 1, fresh-module BN params (gamma=1, beta=0).
    N, C_in, C_out, L, K, stride = 2, 4, 8, 16, 3, 1
    x = jax.random.normal(k1, (N, C_in, L), jnp.float32)
    w = jax.random.normal(k2, (C_out, C_in, K), jnp.float32) * 0.1
    _check("cfg1", x, w, jnp.ones((C_out,), jnp.float32),
           jnp.zeros((C_out,), jnp.float32), stride=stride)

    # Config 2: stride 2, non-trivial affine params (generality check).
    N2, C_in2, C_out2, L2, K2, stride2 = 2, 3, 6, 16, 3, 2
    x2 = jax.random.normal(k3, (N2, C_in2, L2), jnp.float32)
    w2 = jax.random.normal(k4, (C_out2, C_in2, K2), jnp.float32) * 0.1
    g2 = 1.0 + 0.1 * jax.random.normal(k5, (C_out2,), jnp.float32)
    b2 = 0.1 * jax.random.normal(k6, (C_out2,), jnp.float32)
    _check("cfg2", x2, w2, g2, b2, stride=stride2)

    # Config 3: longer sequence with a small forced tile so the grid has multiple
    # L tiles, two core groups (per-group partial stats) and zero-padded tiles.
    N3, C_in3, C_out3, L3, K3, stride3 = 2, 4, 8, 300, 3, 1
    x3 = jax.random.normal(k7, (N3, C_in3, L3), jnp.float32)
    w3 = jax.random.normal(k8, (C_out3, C_in3, K3), jnp.float32) * 0.1
    _check("cfg3", x3, w3, jnp.ones((C_out3,), jnp.float32),
           jnp.zeros((C_out3,), jnp.float32), stride=stride3, tile_l=128)

    print("KERNEL_OK")
</pallas_src>

<mosaic_0001>
module attributes {stable_mosaic.version = 11 : i64} {
  func.func @_conv_stats_kernel(%arg0: i32, %arg1: i32, %arg2: i32, %arg3: memref<16x16xbf16, #tpu.memory_space<vmem>>, %arg4: memref<1x16x128xbf16, #tpu.memory_space<vmem>>, %arg5: memref<1x16x128xbf16, #tpu.memory_space<vmem>>, %arg6: memref<1x16x2xf32, #tpu.memory_space<vmem>>, %arg7: memref<16x2xf32, #tpu.memory_space<vmem>>) attributes {dimension_semantics = [#tpu.dimension_semantics<parallel>, #tpu.dimension_semantics<arbitrary>, #tpu.dimension_semantics<arbitrary>], iteration_bounds = array<i64: 1, 2, 1>, scalar_prefetch = 0 : i64, scratch_operands = 1 : i64, tpu.core_type = #tpu.core_type<tc>, window_params = [{pipeline_mode = #tpu.pipeline_mode<synchronous>, transform_indices = @transform_0, window_bounds = array<i64: 16, 16>}, {transform_indices = @transform_1, window_bounds = array<i64: 1, 16, 128>}, {transform_indices = @transform_2, window_bounds = array<i64: 1, 16, 128>}, {transform_indices = @transform_3, window_bounds = array<i64: 1, 16, 2>}]} {
    %c0_i32 = arith.constant 0 : i32
    %0 = arith.cmpi eq, %arg1, %c0_i32 : i32
    %c0_i32_0 = arith.constant 0 : i32
    %1 = arith.cmpi eq, %arg2, %c0_i32_0 : i32
    %2 = arith.andi %0, %1 : i1
    %3 = arith.extui %2 : i1 to i32
    %c0_i32_1 = arith.constant 0 : i32
    %4 = arith.cmpi ne, %3, %c0_i32_1 : i32
    scf.if %4 {
      %cst_17 = arith.constant 0.000000e+00 : f32
      %27 = vector.broadcast %cst_17 : f32 to vector<16x2xf32>
      %c0_18 = arith.constant 0 : index
      %c0_19 = arith.constant 0 : index
      %28 = vector.load %arg7[%c0_18, %c0_19] : memref<16x2xf32, #tpu.memory_space<vmem>>, vector<16x2xf32>
      tpu.vector_store %arg7[%c0_18, %c0_19], %27 {strides = array<i32>} : memref<16x2xf32, #tpu.memory_space<vmem>>, vector<16x2xf32>,
    } else {
    }
    %c0 = arith.constant 0 : index
    %c0_2 = arith.constant 0 : index
    %5 = vector.load %arg3[%c0, %c0_2] : memref<16x16xbf16, #tpu.memory_space<vmem>>, vector<16x16xbf16>
    %c0_3 = arith.constant 0 : index
    %c0_4 = arith.constant 0 : index
    %c0_5 = arith.constant 0 : index
    %6 = vector.load %arg4[%c0_3, %c0_4, %c0_5] : memref<1x16x128xbf16, #tpu.memory_space<vmem>>, vector<1x16x128xbf16>
    %7 = vector.shape_cast %6 : vector<1x16x128xbf16> to vector<16x128xbf16>
    %cst = arith.constant dense<0.000000e+00> : vector<16x128xf32>
    %8 = tpu.matmul %5, %7, %cst {dimension_numbers = #tpu.dot_dimension_numbers<[1], [0], [0], [1], [0, 0, 1, 1], [], []>} : vector<16x16xbf16>, vector<16x128xbf16>, vector<16x128xf32> -> vector<16x128xf32>
    %9 = arith.truncf %8 : vector<16x128xf32> to vector<16x128xbf16>
    %c0_6 = arith.constant 0 : index
    %c0_7 = arith.constant 0 : index
    %c0_8 = arith.constant 0 : index
    %10 = vector.load %arg5[%c0_6, %c0_7, %c0_8] : memref<1x16x128xbf16, #tpu.memory_space<vmem>>, vector<1x16x128xbf16>
    %11 = vector.shape_cast %10 : vector<1x16x128xbf16> to vector<16x128xbf16>
    %12 = vector.shape_cast %9 : vector<16x128xbf16> to vector<1x16x128xbf16>
    tpu.vector_store %arg5[%c0_6, %c0_7, %c0_8], %12 {strides = array<i32>} : memref<1x16x128xbf16, #tpu.memory_space<vmem>>, vector<1x16x128xbf16>,
    %cst_9 = arith.constant dense<0.000000e+00> : vector<16xf32>
    %13 = vector.multi_reduction <add>, %8, %cst_9 [1] : vector<16x128xf32> to vector<16xf32>
    %14 = vector.shape_cast %13 : vector<16xf32> to vector<16x1xf32>
    %15 = arith.mulf %8, %8 : vector<16x128xf32>
    %cst_10 = arith.constant dense<0.000000e+00> : vector<16xf32>
    %16 = vector.multi_reduction <add>, %15, %cst_10 [1] : vector<16x128xf32> to vector<16xf32>
    %17 = vector.shape_cast %16 : vector<16xf32> to vector<16x1xf32>
    %18 = tpu.concatenate %14, %17 in 1 : vector<16x1xf32>, vector<16x1xf32> -> vector<16x2xf32>
    %c0_11 = arith.constant 0 : index
    %c0_12 = arith.constant 0 : index
    %19 = vector.load %arg7[%c0_11, %c0_12] : memref<16x2xf32, #tpu.memory_space<vmem>>, vector<16x2xf32>
    %20 = arith.addf %19, %18 : vector<16x2xf32>
    %c0_13 = arith.constant 0 : index
    %c0_14 = arith.constant 0 : index
    %21 = vector.load %arg7[%c0_13, %c0_14] : memref<16x2xf32, #tpu.memory_space<vmem>>, vector<16x2xf32>
    tpu.vector_store %arg7[%c0_13, %c0_14], %20 {strides = array<i32>} : memref<16x2xf32, #tpu.memory_space<vmem>>, vector<16x2xf32>,
    %c1_i32 = arith.constant 1 : i32
    %22 = arith.cmpi eq, %arg1, %c1_i32 : i32
    %c0_i32_15 = arith.constant 0 : i32
    %23 = arith.cmpi eq, %arg2, %c0_i32_15 : i32
    %24 = arith.andi %22, %23 : i1
    %25 = arith.extui %24 : i1 to i32
    %c0_i32_16 = arith.constant 0 : i32
    %26 = arith.cmpi ne, %25, %c0_i32_16 : i32
    scf.if %26 {
      %c0_17 = arith.constant 0 : index
      %c0_18 = arith.constant 0 : index
      %27 = vector.load %arg7[%c0_17, %c0_18] : memref<16x2xf32, #tpu.memory_space<vmem>>, vector<16x2xf32>
      %c0_19 = arith.constant 0 : index
      %c0_20 = arith.constant 0 : index
      %c0_21 = arith.constant 0 : index
      %28 = vector.load %arg6[%c0_19, %c0_20, %c0_21] : memref<1x16x2xf32, #tpu.memory_space<vmem>>, vector<1x16x2xf32>
      %29 = vector.shape_cast %28 : vector<1x16x2xf32> to vector<16x2xf32>
      %30 = vector.shape_cast %27 : vector<16x2xf32> to vector<1x16x2xf32>
      tpu.vector_store %arg6[%c0_19, %c0_20, %c0_21], %30 {strides = array<i32>} : memref<1x16x2xf32, #tpu.memory_space<vmem>>, vector<1x16x2xf32>,
    } else {
    }
    return
  }
  func.func @transform_0(%arg0: i32, %arg1: i32, %arg2: i32) -> (i32, i32) {
    %c0_i32 = arith.constant 0 : i32
    %c0_i32_0 = arith.constant 0 : i32
    %c0_i32_1 = arith.constant 0 : i32
    return %c0_i32, %c0_i32_0 : i32, i32
  }
  func.func @transform_1(%arg0: i32, %arg1: i32, %arg2: i32) -> (i32, i32, i32) {
    %c1_i32 = arith.constant 1 : i32
    %0 = arith.muli %arg0, %c1_i32 : i32
    %1 = arith.addi %0, %arg2 : i32
    %c0_i32 = arith.constant 0 : i32
    %c0_i32_0 = arith.constant 0 : i32
    return %arg1, %c0_i32, %1 : i32, i32, i32
  }
  func.func @transform_2(%arg0: i32, %arg1: i32, %arg2: i32) -> (i32, i32, i32) {
    %c1_i32 = arith.constant 1 : i32
    %0 = arith.muli %arg0, %c1_i32 : i32
    %1 = arith.addi %0, %arg2 : i32
    %c0_i32 = arith.constant 0 : i32
    %c0_i32_0 = arith.constant 0 : i32
    return %arg1, %c0_i32, %1 : i32, i32, i32
  }
  func.func @transform_3(%arg0: i32, %arg1: i32, %arg2: i32) -> (i32, i32, i32) {
    %c0_i32 = arith.constant 0 : i32
    %c0_i32_0 = arith.constant 0 : i32
    %c0_i32_1 = arith.constant 0 : i32
    return %arg0, %c0_i32, %c0_i32_0 : i32, i32, i32
  }
}

module attributes {stable_mosaic.version = 11 : i64} {
  func.func @_bn_silu_kernel(%arg0: i32, %arg1: i32, %arg2: memref<1x16x128xbf16, #tpu.memory_space<vmem>>, %arg3: memref<16x1xf32, #tpu.memory_space<vmem>>, %arg4: memref<16x1xf32, #tpu.memory_space<vmem>>, %arg5: memref<1x16x128xf32, #tpu.memory_space<vmem>>) attributes {dimension_semantics = [#tpu.dimension_semantics<parallel>, #tpu.dimension_semantics<parallel>], iteration_bounds = array<i64: 2, 1>, scalar_prefetch = 0 : i64, scratch_operands = 0 : i64, tpu.core_type = #tpu.core_type<tc>, window_params = [{transform_indices = @transform_0, window_bounds = array<i64: 1, 16, 128>}, {pipeline_mode = #tpu.pipeline_mode<synchronous>, transform_indices = @transform_1, window_bounds = array<i64: 16, 1>}, {pipeline_mode = #tpu.pipeline_mode<synchronous>, transform_indices = @transform_2, window_bounds = array<i64: 16, 1>}, {transform_indices = @transform_3, window_bounds = array<i64: 1, 16, 128>}]} {
    %c0 = arith.constant 0 : index
    %c0_0 = arith.constant 0 : index
    %c0_1 = arith.constant 0 : index
    %0 = vector.load %arg2[%c0, %c0_0, %c0_1] : memref<1x16x128xbf16, #tpu.memory_space<vmem>>, vector<1x16x128xbf16>
    %1 = vector.shape_cast %0 : vector<1x16x128xbf16> to vector<16x128xbf16>
    %2 = arith.extf %1 : vector<16x128xbf16> to vector<16x128xf32>
    %c0_2 = arith.constant 0 : index
    %c0_3 = arith.constant 0 : index
    %3 = vector.load %arg3[%c0_2, %c0_3] : memref<16x1xf32, #tpu.memory_space<vmem>>, vector<16x1xf32>
    %4 = vector.broadcast %3 : vector<16x1xf32> to vector<16x128xf32>
    %5 = arith.mulf %2, %4 : vector<16x128xf32>
    %c0_4 = arith.constant 0 : index
    %c0_5 = arith.constant 0 : index
    %6 = vector.load %arg4[%c0_4, %c0_5] : memref<16x1xf32, #tpu.memory_space<vmem>>, vector<16x1xf32>
    %7 = vector.broadcast %6 : vector<16x1xf32> to vector<16x128xf32>
    %8 = arith.addf %5, %7 : vector<16x128xf32>
    %cst = arith.constant 0.000000e+00 : f32
    %9 = vector.broadcast %cst : f32 to vector<16x128xf32>
    %10 = arith.subf %9, %8 : vector<16x128xf32>
    %11 = math.exp %10 : vector<16x128xf32>
    %cst_6 = arith.constant 1.000000e+00 : f32
    %12 = vector.broadcast %cst_6 : f32 to vector<16x128xf32>
    %13 = arith.addf %12, %11 : vector<16x128xf32>
    %14 = tpu.reciprocal %13 {approx = true} : vector<16x128xf32> -> vector<16x128xf32>
    %15 = arith.mulf %8, %14 : vector<16x128xf32>
    %c0_7 = arith.constant 0 : index
    %c0_8 = arith.constant 0 : index
    %c0_9 = arith.constant 0 : index
    %16 = vector.load %arg5[%c0_7, %c0_8, %c0_9] : memref<1x16x128xf32, #tpu.memory_space<vmem>>, vector<1x16x128xf32>
    %17 = vector.shape_cast %16 : vector<1x16x128xf32> to vector<16x128xf32>
    %18 = vector.shape_cast %15 : vector<16x128xf32> to vector<1x16x128xf32>
    tpu.vector_store %arg5[%c0_7, %c0_8, %c0_9], %18 {strides = array<i32>} : memref<1x16x128xf32, #tpu.memory_space<vmem>>, vector<1x16x128xf32>,
    return
  }
  func.func @transform_0(%arg0: i32, %arg1: i32) -> (i32, i32, i32) {
    %c0_i32 = arith.constant 0 : i32
    %c0_i32_0 = arith.constant 0 : i32
    return %arg0, %c0_i32, %arg1 : i32, i32, i32
  }
  func.func @transform_1(%arg0: i32, %arg1: i32) -> (i32, i32) {
    %c0_i32 = arith.constant 0 : i32
    %c0_i32_0 = arith.constant 0 : i32
    %c0_i32_1 = arith.constant 0 : i32
    return %c0_i32, %c0_i32_0 : i32, i32
  }
  func.func @transform_2(%arg0: i32, %arg1: i32) -> (i32, i32) {
    %c0_i32 = arith.constant 0 : i32
    %c0_i32_0 = arith.constant 0 : i32
    %c0_i32_1 = arith.constant 0 : i32
    return %c0_i32, %c0_i32_0 : i32, i32
  }
  func.func @transform_3(%arg0: i32, %arg1: i32) -> (i32, i32, i32) {
    %c0_i32 = arith.constant 0 : i32
    %c0_i32_0 = arith.constant 0 : i32
    return %arg0, %c0_i32, %arg1 : i32, i32, i32
  }
}

</mosaic_0001>

<llo_original>
// kernel: cbs_forward.3
$region0: #{cbs_forward.3}
  #allocation0 [shape = 'u32[]', space=smem, size = 0x4, offset = 0x4, fixed_abs, tag = 'smem constant byte address 0x4 - core index']
  #allocation1 [shape = 'u32[144,128]{1,0:T(1,128)}', space=vmem, size = 0x12000, scoped, tag = 'internal scratch']
  %s0 = inlined_call_operand.vmem [shape: bf16[2,16,128], index: 0, kind: input, shape index: {}]
  %s1 = inlined_call_operand.vmem [shape: f32[16,1], index: 1, kind: input, shape index: {}]
  %s2 = inlined_call_operand.vmem [shape: f32[16,1], index: 2, kind: input, shape index: {}]
  %s3 = inlined_call_operand.vmem [shape: f32[2,16,128], index: 3, kind: output, shape index: {}]
  %s4 = sld [smem:[#allocation0]]
  $region45: #{cbs_forward.3} parent=0
    _
  %s6 = ssub.s32 1, %s4
  %s7 = scalar_select 0, %s6, %s4
  loop: start=0, step=1, limit=4
  $region2: #{cbs_forward.3} parent=0 // loop_pre_header
    _
  $region3: #{cbs_forward.3} parent=0 // loop_header
    %s9 = sphi 0, %s13
    %p10 = scmp.ge.s32.totalorder %s9, 4
    %s16 = sphi 0, %s28
    %s17 = sphi 0, %s24
    %s18 = sphi 0, %s16
    %s19 = sphi 0, %s17
    %s20 = sphi 0, %s18
    %s21 = sphi 0, %s19
    %s33 = sphi 0, %s35
    %s36 = sphi 0, %s33
    %s37 = sphi 0, %s36
    %s53 = sphi 0, %s37
    %s57 = sphi 0, %s57
    %s59 = sphi 0, %s57
    %s60 = sphi 0, %s59
    %s74 = sphi 0, %s60
    %s78 = sphi 0, %s78
    %s80 = sphi 0, %s78
    %s81 = sphi 0, %s80
    %s95 = sphi 0, %s81
    %s103 = sphi 0, %s105
    %s106 = sphi 0, %s103
    %s107 = sphi 0, %s106
    %s123 = sphi 0, %s107
  $region4: #{cbs_forward.3} parent=0 // loop_header_branch
    %12 = sbr.rel (%p10) target = $region8
  $region5: #{cbs_forward.3} parent=0 // loop_body
    %s14 = ssub.s32 %s9, 1
    %s15 = ssub.s32 %s9, 2
    %s22 = sadd.s32 1, %s17
    %p23 = scmp.ge.s32.totalorder %s22, 1
    %s24 = scalar_select %p23, 0, %s22
    %s25 = sadd.s32 1, %s16
    %s26 = scalar_select %p23, %s25, %s16
    %p27 = scmp.ge.s32.totalorder %s26, 2
    %s28 = scalar_select %p27, 0, %s26
    %s29 = ssub.s32 %s16, %s28
    %s30 = ssub.s32 %s17, %s24
    %s31 = sor.u32 %s29, %s30
    %p32 = scmp.eq.s32.totalorder %s31, 0
    %s34 = sadd.s32 %s33, 1
    %s35 = scalar_select %p32, %s33, %s34
    %p38 = pneg %p32
    %p39 = scmp.eq.s32.totalorder %s9, 1
    %p40 = por %p38, %p39
    %p41 = scmp.ne.s32.totalorder %s33, %s36
    %p42 = scmp.eq.s32.totalorder %s9, 0
    %p43 = por %p41, %p42
    %p44 = scmp.ne.s32.totalorder %s33, %s36
    %p45 = scmp.eq.s32.totalorder %s14, 1
    %p46 = por %p44, %p45
    %p47 = scmp.ne.s32.totalorder %s36, %s37
    %p48 = scmp.eq.s32.totalorder %s14, 0
    %p49 = por %p47, %p48
    %p50 = scmp.ne.s32.totalorder %s36, %s37
    %p51 = scmp.eq.s32.totalorder %s15, 1
    %p52 = por %p50, %p51
    %p54 = scmp.ne.s32.totalorder %s37, %s53
    %p55 = scmp.eq.s32.totalorder %s15, 0
    %p56 = por %p54, %p55
    %s58 = sadd.s32 %s57, 1
    %p61 = scmp.eq.s32.totalorder %s9, 1
    %p62 = scmp.ne.s32.totalorder %s57, %s59
    %p63 = scmp.eq.s32.totalorder %s9, 0
    %p64 = por %p62, %p63
    %p65 = scmp.ne.s32.totalorder %s57, %s59
    %p66 = scmp.eq.s32.totalorder %s14, 1
    %p67 = por %p65, %p66
    %p68 = scmp.ne.s32.totalorder %s59, %s60
    %p69 = scmp.eq.s32.totalorder %s14, 0
    %p70 = por %p68, %p69
    %p71 = scmp.ne.s32.totalorder %s59, %s60
    %p72 = scmp.eq.s32.totalorder %s15, 1
    %p73 = por %p71, %p72
    %p75 = scmp.ne.s32.totalorder %s60, %s74
    %p76 = scmp.eq.s32.totalorder %s15, 0
    %p77 = por %p75, %p76
    %s79 = sadd.s32 %s78, 1
    %p82 = scmp.eq.s32.totalorder %s9, 1
    %p83 = scmp.ne.s32.totalorder %s78, %s80
    %p84 = scmp.eq.s32.totalorder %s9, 0
    %p85 = por %p83, %p84
    %p86 = scmp.ne.s32.totalorder %s78, %s80
    %p87 = scmp.eq.s32.totalorder %s14, 1
    %p88 = por %p86, %p87
    %p89 = scmp.ne.s32.totalorder %s80, %s81
    %p90 = scmp.eq.s32.totalorder %s14, 0
    %p91 = por %p89, %p90
    %p92 = scmp.ne.s32.totalorder %s80, %s81
    %p93 = scmp.eq.s32.totalorder %s15, 1
    %p94 = por %p92, %p93
    %p96 = scmp.ne.s32.totalorder %s81, %s95
    %p97 = scmp.eq.s32.totalorder %s15, 0
    %p98 = por %p96, %p97
    %s99 = ssub.s32 %s16, %s28
    %s100 = ssub.s32 %s17, %s24
    %s101 = sor.u32 %s99, %s100
    %p102 = scmp.eq.s32.totalorder %s101, 0
    %s104 = sadd.s32 %s103, 1
    %s105 = scalar_select %p102, %s103, %s104
    %p108 = pneg %p102
    %p109 = scmp.eq.s32.totalorder %s9, 1
    %p110 = por %p108, %p109
    %p111 = scmp.ne.s32.totalorder %s103, %s106
    %p112 = scmp.eq.s32.totalorder %s9, 0
    %p113 = por %p111, %p112
    %p114 = scmp.ne.s32.totalorder %s103, %s106
    %p115 = scmp.eq.s32.totalorder %s14, 1
    %p116 = por %p114, %p115
    %p117 = scmp.ne.s32.totalorder %s106, %s107
    %p118 = scmp.eq.s32.totalorder %s14, 0
    %p119 = por %p117, %p118
    %p120 = scmp.ne.s32.totalorder %s106, %s107
    %p121 = scmp.eq.s32.totalorder %s15, 1
    %p122 = por %p120, %p121
    %p124 = scmp.ne.s32.totalorder %s107, %s123
    %p125 = scmp.eq.s32.totalorder %s15, 0
    %p126 = por %p124, %p125
    %p127 = scmp.le.s32.totalorder 1, %s9
    %p128 = scmp.lt.s32.totalorder %s9, 3
    %p129 = pnand %p127, %p128
    %p130 = pneg %p129
    // Predicated region
    $region9: #{cbs_forward.3} parent=5 // pred_check
      _
    $region10: #{cbs_forward.3} parent=5 // pred_check_branch
      %132 = sbr.rel (%p129) target = $region12
    $region11: #{cbs_forward.3} parent=5 // pred_region
      %s133 = ssub.s32 %s9, 1
      // Predicated region
      $region13: #{cbs_forward.3} parent=11 // pred_check
        %p134 = pneg %p70
      $region14: #{cbs_forward.3} parent=11 // pred_check_branch
        %136 = sbr.rel (%p134) target = $region16
      $region15: #{cbs_forward.3} parent=11 // pred_region
        _
      $region16: #{cbs_forward.3} parent=11 // pred_fallthru
        _
      // Predicated region
      $region17: #{cbs_forward.3} parent=11 // pred_check
        %p137 = pneg %p91
      $region18: #{cbs_forward.3} parent=11 // pred_check_branch
        %139 = sbr.rel (%p137) target = $region20
      $region19: #{cbs_forward.3} parent=11 // pred_region
        _
      $region20: #{cbs_forward.3} parent=11 // pred_fallthru
        _
    $region12: #{cbs_forward.3} parent=5 // pred_fallthru
      _
    %p140 = scmp.lt.s32.totalorder %s9, 2
    // Predicated region
    $region21: #{cbs_forward.3} parent=5 // pred_check
      %p141 = pneg %p140
    $region22: #{cbs_forward.3} parent=5 // pred_check_branch
      %143 = sbr.rel (%p141) target = $region24
    $region23: #{cbs_forward.3} parent=5 // pred_region
      // Predicated region
      $region25: #{cbs_forward.3} parent=23 // pred_check
        %p144 = pneg %p43
      $region26: #{cbs_forward.3} parent=23 // pred_check_branch
        %146 = sbr.rel (%p144) target = $region28
      $region27: #{cbs_forward.3} parent=23 // pred_region
        %p147 = scmp.lt.s32.totalorder %s16, 1
        %s148 = scalar_select %p147, %s16, 1
        %p149 = scmp.lt.s32.totalorder %s17, 0
        %s150 = scalar_select %p149, %s17, 0
        %s151 = smul.addr %s148, 2
        %s152 = sadd.s32 %s150, %s151
        %s153 = smul.addr %s152, 4
        %s154 = scalar_lea.vmem %s0, %s153
      $region28: #{cbs_forward.3} parent=23 // pred_fallthru
        _
    $region24: #{cbs_forward.3} parent=5 // pred_fallthru
      _
    %p155 = scmp.le.s32.totalorder 1, %s9
    %p156 = scmp.lt.s32.totalorder %s9, 3
    %p157 = pnand %p155, %p156
    %p158 = pneg %p157
    // Predicated region
    $region29: #{cbs_forward.3} parent=5 // pred_check
      _
    $region30: #{cbs_forward.3} parent=5 // pred_check_branch
      %160 = sbr.rel (%p157) target = $region32
    $region31: #{cbs_forward.3} parent=5 // pred_region
      %s161 = ssub.s32 %s9, 1
      %p162 = scmp.lt.s32.totalorder %s18, 1
      %s163 = scalar_select %p162, %s18, 1
      %p164 = scmp.lt.s32.totalorder %s19, 0
      %s165 = scalar_select %p164, %s19, 0
      %s166 = smul.addr %s163, 2
      %s167 = sadd.s32 %s165, %s166
      %s168 = smul.addr %s167, 4
      %s169 = scalar_lea.vmem %s0, %s168
      %p170 = pneg %p49
      %p171 = pneg %p46
      %p172 = pneg %p70
      %p173 = pneg %p67
      %p174 = pneg %p91
      %p175 = pneg %p88
      %p176 = pneg %p119
      %p177 = pneg %p116
      %p178 = scmp.lt.s32.totalorder %s18, 1
      %s179 = scalar_select %p178, %s18, 1
      %p180 = scmp.lt.s32.totalorder %s19, 0
      %s181 = scalar_select %p180, %s19, 0
      %s182 = smul.addr %s179, 2
      %s183 = sadd.s32 %s181, %s182
      %s184 = smul.addr %s183, 8
      %s185 = scalar_lea.vmem %s3, %s184
      %p186 = scmp.lt.s32.totalorder %s18, 1
      %s187 = scalar_select %p186, %s18, 1
      %p188 = scmp.lt.s32.totalorder %s19, 0
      %s189 = scalar_select %p188, %s19, 0
      %s190 = smul.addr %s187, 2
      %s191 = sadd.s32 %s189, %s190
      %s192 = smul.addr %s191, 4
      %s193 = scalar_lea.vmem %s0, %s192
      %p194 = scmp.lt.s32.totalorder %s18, 1
      %s195 = scalar_select %p194, %s18, 1
      %p196 = scmp.lt.s32.totalorder %s19, 0
      %s197 = scalar_select %p196, %s19, 0
      %s198 = smul.addr %s195, 2
      %s199 = sadd.s32 %s197, %s198
      %s200 = smul.addr %s199, 8
      %s201 = scalar_lea.vmem %s3, %s200
      %v202 = vld [vmem:[%s193] sm:$0xf]
      %v203 = vld [vmem:[%s193 + $0x4] sm:$0xf]
      %v204 = vunpack.c.l.bf16 %v202
      %v205 = vunpack.c.l.bf16 %v203
      %v206 = vld [vmem:[%s1] sm:$0xff]
      %v207 = vld [vmem:[%s1 + $0x8] sm:$0xff]
      %209 = vset.pattern.permute.xlu0 0
      %210 = vperm.xlu0 %209, %v206
      %v211 = vpop.permute.xlu0 %210
      %214 = vset.pattern.permute.xlu0 0
      %215 = vperm.xlu0 %214, %v207
      %v216 = vpop.permute.xlu0 %215
      %v218 = vmul.f32 %v204, %v211
      %v219 = vmul.f32 %v205, %v216
      %v220 = vld [vmem:[%s2] sm:$0xff]
      %v221 = vld [vmem:[%s2 + $0x8] sm:$0xff]
      %223 = vset.pattern.permute.xlu0 0
      %224 = vperm.xlu0 %223, %v220
      %v225 = vpop.permute.xlu0 %224
      %228 = vset.pattern.permute.xlu0 0
      %229 = vperm.xlu0 %228, %v221
      %v230 = vpop.permute.xlu0 %229
      %v232 = vadd.f32 %v218, %v225
      %v233 = vadd.f32 %v219, %v230
      %v234 = vsub.f32 0.0, %v232
      %v235 = vsub.f32 0.0, %v233
      %v236 = vmul.f32 %v234, 1.442695
      %v237 = vpow.pop %v236
      %v238 = vmul.f32 %v235, 1.442695
      %v239 = vpow.pop %v238
      %v240 = vadd.f32 %v237, 1.0
      %v241 = vadd.f32 %v239, 1.0
      %v242 = vrcp.pop %v240
      %v243 = vrcp.pop %v241
      %v244 = vmul.f32 %v232, %v242
      %v245 = vmul.f32 %v233, %v243
      %246 = vst [vmem:[%s201] sm:$0xff] %v244
      %247 = vst [vmem:[%s201 + $0x8] sm:$0xff] %v245
      %p248 = scmp.lt.s32.totalorder %s18, 1
      %s249 = scalar_select %p248, %s18, 1
      %p250 = scmp.lt.s32.totalorder %s19, 0
      %s251 = scalar_select %p250, %s19, 0
      %s252 = smul.addr %s249, 2
      %s253 = sadd.s32 %s251, %s252
      %s254 = smul.addr %s253, 8
      %s255 = scalar_lea.vmem %s3, %s254
      // Predicated region
      $region33: #{cbs_forward.3} parent=31 // pred_check
        %p256 = pneg %p116
      $region34: #{cbs_forward.3} parent=31 // pred_check_branch
        %258 = sbr.rel (%p256) target = $region36
      $region35: #{cbs_forward.3} parent=31 // pred_region
        _
      $region36: #{cbs_forward.3} parent=31 // pred_fallthru
        _
    $region32: #{cbs_forward.3} parent=5 // pred_fallthru
      _
    %p259 = scmp.le.s32.totalorder 2, %s9
    // Predicated region
    $region37: #{cbs_forward.3} parent=5 // pred_check
      %p260 = pneg %p259
    $region38: #{cbs_forward.3} parent=5 // pred_check_branch
      %262 = sbr.rel (%p260) target = $region40
    $region39: #{cbs_forward.3} parent=5 // pred_region
      %s263 = ssub.s32 %s9, 2
      // Predicated region
      $region41: #{cbs_forward.3} parent=39 // pred_check
        %p264 = pneg %p122
      $region42: #{cbs_forward.3} parent=39 // pred_check_branch
        %266 = sbr.rel (%p264) target = $region44
      $region43: #{cbs_forward.3} parent=39 // pred_region
        %p267 = scmp.lt.s32.totalorder %s20, 1
        %s268 = scalar_select %p267, %s20, 1
        %p269 = scmp.lt.s32.totalorder %s21, 0
        %s270 = scalar_select %p269, %s21, 0
        %s271 = smul.addr %s268, 2
        %s272 = sadd.s32 %s270, %s271
        %s273 = smul.addr %s272, 8
        %s274 = scalar_lea.vmem %s3, %s273
      $region44: #{cbs_forward.3} parent=39 // pred_fallthru
        _
    $region40: #{cbs_forward.3} parent=5 // pred_fallthru
      _
  $region6: #{cbs_forward.3} parent=0 // loop_footer
    %s13 = sadd.s32 1, %s9
  $region7: #{cbs_forward.3} parent=0 // loop_footer_branch
    %8 = sbr.rel target = $region3
  $region8: #{cbs_forward.3} parent=0 // loop_exit
    _

// kernel: cbs_forward.2
$region0: #{cbs_forward.2}
  #allocation0 [shape = 'u32[]', space=smem, size = 0x4, offset = 0x4, fixed_abs, tag = 'smem constant byte address 0x4 - core index']
  #allocation1 [shape = 'u32[144,128]{1,0:T(1,128)}', space=vmem, size = 0x12000, scoped, tag = 'internal scratch']
  #allocation2 [shape = 'f32[16,2]{1,0:T(8,128)}', space=vmem, size = 0x2000, scoped, tag = 'scratch operand']
  %s0 = inlined_call_operand.vmem [shape: bf16[16,16], index: 0, kind: input, shape index: {}]
  %s1 = inlined_call_operand.vmem [shape: bf16[2,16,128], index: 1, kind: input, shape index: {}]
  %s2 = inlined_call_operand.vmem [shape: bf16[2,16,128], index: 2, kind: output, shape index: {0}]
  %s3 = inlined_call_operand.vmem [shape: f32[1,16,2], index: 3, kind: output, shape index: {1}]
  %4 = xla_tuple %s2, %s3
  %s5 = sld [smem:[#allocation0]]
  $region57: #{cbs_forward.2} parent=0
    _
  %s7 = ssub.s32 1, %s5
  %s8 = scalar_select 0, %s7, %s5
  loop: start=0, step=1, limit=4
  $region2: #{cbs_forward.2} parent=0 // loop_pre_header
    _
  $region3: #{cbs_forward.2} parent=0 // loop_header
    %s10 = sphi 0, %s14
    %p11 = scmp.ge.s32.totalorder %s10, 4
    %s17 = sphi 0, %s36
    %s18 = sphi 0, %s32
    %s19 = sphi 0, %s28
    %s20 = sphi 0, %s17
    %s21 = sphi 0, %s18
    %s22 = sphi 0, %s19
    %s23 = sphi 0, %s20
    %s24 = sphi 0, %s21
    %s25 = sphi 0, %s22
    %s37 = sphi 0, %s37
    %s39 = sphi 0, %s37
    %s40 = sphi 0, %s39
    %s54 = sphi 0, %s40
    %s64 = sphi 0, %s66
    %s67 = sphi 0, %s64
    %s68 = sphi 0, %s67
    %s84 = sphi 0, %s68
    %s94 = sphi 0, %s96
    %s97 = sphi 0, %s94
    %s98 = sphi 0, %s97
    %s114 = sphi 0, %s98
    %s120 = sphi 0, %s122
    %s123 = sphi 0, %s120
    %s124 = sphi 0, %s123
    %s140 = sphi 0, %s124
  $region4: #{cbs_forward.2} parent=0 // loop_header_branch
    %13 = sbr.rel (%p11) target = $region8
  $region5: #{cbs_forward.2} parent=0 // loop_body
    %s15 = ssub.s32 %s10, 1
    %s16 = ssub.s32 %s10, 2
    %s26 = sadd.s32 1, %s19
    %p27 = scmp.ge.s32.totalorder %s26, 1
    %s28 = scalar_select %p27, 0, %s26
    %s29 = sadd.s32 1, %s18
    %s30 = scalar_select %p27, %s29, %s18
    %p31 = scmp.ge.s32.totalorder %s30, 2
    %s32 = scalar_select %p31, 0, %s30
    %s33 = sadd.s32 1, %s17
    %s34 = scalar_select %p31, %s33, %s17
    %p35 = scmp.ge.s32.totalorder %s34, 1
    %s36 = scalar_select %p35, 0, %s34
    %s38 = sadd.s32 %s37, 1
    %p41 = scmp.eq.s32.totalorder %s10, 1
    %p42 = scmp.ne.s32.totalorder %s37, %s39
    %p43 = scmp.eq.s32.totalorder %s10, 0
    %p44 = por %p42, %p43
    %p45 = scmp.ne.s32.totalorder %s37, %s39
    %p46 = scmp.eq.s32.totalorder %s15, 1
    %p47 = por %p45, %p46
    %p48 = scmp.ne.s32.totalorder %s39, %s40
    %p49 = scmp.eq.s32.totalorder %s15, 0
    %p50 = por %p48, %p49
    %p51 = scmp.ne.s32.totalorder %s39, %s40
    %p52 = scmp.eq.s32.totalorder %s16, 1
    %p53 = por %p51, %p52
    %p55 = scmp.ne.s32.totalorder %s40, %s54
    %p56 = scmp.eq.s32.totalorder %s16, 0
    %p57 = por %p55, %p56
    %s58 = sadd.s32 %s17, %s19
    %s59 = sadd.s32 %s36, %s28
    %s60 = ssub.s32 %s18, %s32
    %s61 = ssub.s32 %s58, %s59
    %s62 = sor.u32 %s60, %s61
    %p63 = scmp.eq.s32.totalorder %s62, 0
    %s65 = sadd.s32 %s64, 1
    %s66 = scalar_select %p63, %s64, %s65
    %p69 = pneg %p63
    %p70 = scmp.eq.s32.totalorder %s10, 1
    %p71 = por %p69, %p70
    %p72 = scmp.ne.s32.totalorder %s64, %s67
    %p73 = scmp.eq.s32.totalorder %s10, 0
    %p74 = por %p72, %p73
    %p75 = scmp.ne.s32.totalorder %s64, %s67
    %p76 = scmp.eq.s32.totalorder %s15, 1
    %p77 = por %p75, %p76
    %p78 = scmp.ne.s32.totalorder %s67, %s68
    %p79 = scmp.eq.s32.totalorder %s15, 0
    %p80 = por %p78, %p79
    %p81 = scmp.ne.s32.totalorder %s67, %s68
    %p82 = scmp.eq.s32.totalorder %s16, 1
    %p83 = por %p81, %p82
    %p85 = scmp.ne.s32.totalorder %s68, %s84
    %p86 = scmp.eq.s32.totalorder %s16, 0
    %p87 = por %p85, %p86
    %s88 = sadd.s32 %s17, %s19
    %s89 = sadd.s32 %s36, %s28
    %s90 = ssub.s32 %s18, %s32
    %s91 = ssub.s32 %s88, %s89
    %s92 = sor.u32 %s90, %s91
    %p93 = scmp.eq.s32.totalorder %s92, 0
    %s95 = sadd.s32 %s94, 1
    %s96 = scalar_select %p93, %s94, %s95
    %p99 = pneg %p93
    %p100 = scmp.eq.s32.totalorder %s10, 1
    %p101 = por %p99, %p100
    %p102 = scmp.ne.s32.totalorder %s94, %s97
    %p103 = scmp.eq.s32.totalorder %s10, 0
    %p104 = por %p102, %p103
    %p105 = scmp.ne.s32.totalorder %s94, %s97
    %p106 = scmp.eq.s32.totalorder %s15, 1
    %p107 = por %p105, %p106
    %p108 = scmp.ne.s32.totalorder %s97, %s98
    %p109 = scmp.eq.s32.totalorder %s15, 0
    %p110 = por %p108, %p109
    %p111 = scmp.ne.s32.totalorder %s97, %s98
    %p112 = scmp.eq.s32.totalorder %s16, 1
    %p113 = por %p111, %p112
    %p115 = scmp.ne.s32.totalorder %s98, %s114
    %p116 = scmp.eq.s32.totalorder %s16, 0
    %p117 = por %p115, %p116
    %s118 = ssub.s32 %s17, %s36
    %p119 = scmp.eq.s32.totalorder %s118, 0
    %s121 = sadd.s32 %s120, 1
    %s122 = scalar_select %p119, %s120, %s121
    %p125 = pneg %p119
    %p126 = scmp.eq.s32.totalorder %s10, 1
    %p127 = por %p125, %p126
    %p128 = scmp.ne.s32.totalorder %s120, %s123
    %p129 = scmp.eq.s32.totalorder %s10, 0
    %p130 = por %p128, %p129
    %p131 = scmp.ne.s32.totalorder %s120, %s123
    %p132 = scmp.eq.s32.totalorder %s15, 1
    %p133 = por %p131, %p132
    %p134 = scmp.ne.s32.totalorder %s123, %s124
    %p135 = scmp.eq.s32.totalorder %s15, 0
    %p136 = por %p134, %p135
    %p137 = scmp.ne.s32.totalorder %s123, %s124
    %p138 = scmp.eq.s32.totalorder %s16, 1
    %p139 = por %p137, %p138
    %p141 = scmp.ne.s32.totalorder %s124, %s140
    %p142 = scmp.eq.s32.totalorder %s16, 0
    %p143 = por %p141, %p142
    %p144 = scmp.le.s32.totalorder 1, %s10
    %p145 = scmp.lt.s32.totalorder %s10, 3
    %p146 = pnand %p144, %p145
    %p147 = pneg %p146
    // Predicated region
    $region9: #{cbs_forward.2} parent=5 // pred_check
      _
    $region10: #{cbs_forward.2} parent=5 // pred_check_branch
      %149 = sbr.rel (%p146) target = $region12
    $region11: #{cbs_forward.2} parent=5 // pred_region
      %s150 = ssub.s32 %s10, 1
      // Predicated region
      $region13: #{cbs_forward.2} parent=11 // pred_check
        %p151 = pneg %p50
      $region14: #{cbs_forward.2} parent=11 // pred_check_branch
        %153 = sbr.rel (%p151) target = $region16
      $region15: #{cbs_forward.2} parent=11 // pred_region
        _
      $region16: #{cbs_forward.2} parent=11 // pred_fallthru
        _
    $region12: #{cbs_forward.2} parent=5 // pred_fallthru
      _
    %p154 = scmp.lt.s32.totalorder %s10, 2
    // Predicated region
    $region17: #{cbs_forward.2} parent=5 // pred_check
      %p155 = pneg %p154
    $region18: #{cbs_forward.2} parent=5 // pred_check_branch
      %157 = sbr.rel (%p155) target = $region20
    $region19: #{cbs_forward.2} parent=5 // pred_region
      // Predicated region
      $region21: #{cbs_forward.2} parent=19 // pred_check
        %p158 = pneg %p74
      $region22: #{cbs_forward.2} parent=19 // pred_check_branch
        %160 = sbr.rel (%p158) target = $region24
      $region23: #{cbs_forward.2} parent=19 // pred_region
        %s161 = sadd.s32 %s17, %s19
        %p162 = scmp.lt.s32.totalorder %s18, 1
        %s163 = scalar_select %p162, %s18, 1
        %p164 = scmp.lt.s32.totalorder %s161, 0
        %s165 = scalar_select %p164, %s161, 0
        %s166 = smul.addr %s163, 2
        %s167 = sadd.s32 %s165, %s166
        %s168 = smul.addr %s167, 4
        %s169 = scalar_lea.vmem %s1, %s168
        %s170 = sadd.s32 %s17, %s19
      $region24: #{cbs_forward.2} parent=19 // pred_fallthru
        _
    $region20: #{cbs_forward.2} parent=5 // pred_fallthru
      _
    %p171 = scmp.le.s32.totalorder 1, %s10
    %p172 = scmp.lt.s32.totalorder %s10, 3
    %p173 = pnand %p171, %p172
    %p174 = pneg %p173
    // Predicated region
    $region25: #{cbs_forward.2} parent=5 // pred_check
      _
    $region26: #{cbs_forward.2} parent=5 // pred_check_branch
      %176 = sbr.rel (%p173) target = $region28
    $region27: #{cbs_forward.2} parent=5 // pred_region
      %s177 = ssub.s32 %s10, 1
      %p178 = pneg %p50
      %p179 = pneg %p47
      %s180 = sadd.s32 %s20, %s22
      %p181 = scmp.lt.s32.totalorder %s21, 1
      %s182 = scalar_select %p181, %s21, 1
      %p183 = scmp.lt.s32.totalorder %s180, 0
      %s184 = scalar_select %p183, %s180, 0
      %s185 = smul.addr %s182, 2
      %s186 = sadd.s32 %s184, %s185
      %s187 = smul.addr %s186, 4
      %s188 = scalar_lea.vmem %s1, %s187
      %p189 = pneg %p80
      %p190 = pneg %p77
      %p191 = pneg %p110
      %p192 = pneg %p107
      %s193 = sadd.s32 %s20, %s22
      %p194 = scmp.lt.s32.totalorder %s21, 1
      %s195 = scalar_select %p194, %s21, 1
      %p196 = scmp.lt.s32.totalorder %s193, 0
      %s197 = scalar_select %p196, %s193, 0
      %s198 = smul.addr %s195, 2
      %s199 = sadd.s32 %s197, %s198
      %s200 = smul.addr %s199, 4
      %s201 = scalar_lea.vmem %s2, %s200
      %p202 = pneg %p136
      %p203 = pneg %p133
      %p204 = scmp.lt.s32.totalorder %s20, 0
      %s205 = scalar_select %p204, %s20, 0
      %s206 = smul.addr %s205, 2
      %s207 = smul.addr %s206, 8
      %s208 = scalar_lea.vmem %s3, %s207
      %s209 = sadd.s32 %s20, %s22
      %p210 = scmp.lt.s32.totalorder %s21, 1
      %s211 = scalar_select %p210, %s21, 1
      %p212 = scmp.lt.s32.totalorder %s209, 0
      %s213 = scalar_select %p212, %s209, 0
      %s214 = smul.addr %s211, 2
      %s215 = sadd.s32 %s213, %s214
      %s216 = smul.addr %s215, 4
      %s217 = scalar_lea.vmem %s1, %s216
      %s218 = sadd.s32 %s20, %s22
      %s219 = sadd.s32 %s20, %s22
      %p220 = scmp.lt.s32.totalorder %s21, 1
      %s221 = scalar_select %p220, %s21, 1
      %p222 = scmp.lt.s32.totalorder %s219, 0
      %s223 = scalar_select %p222, %s219, 0
      %s224 = smul.addr %s221, 2
      %s225 = sadd.s32 %s223, %s224
      %s226 = smul.addr %s225, 4
      %s227 = scalar_lea.vmem %s2, %s226
      %s228 = sadd.s32 %s20, %s22
      %p229 = scmp.lt.s32.totalorder %s20, 0
      %s230 = scalar_select %p229, %s20, 0
      %s231 = smul.addr %s230, 2
      %s232 = smul.addr %s231, 8
      %s233 = scalar_lea.vmem %s3, %s232
      %p235 = scmp.eq.s32.totalorder %s21, 0
      %p236 = scmp.eq.s32.totalorder %s22, 0
      %p237 = pnand %p235, %p236
      %p238 = pneg %p237
      // Predicated region
      $region29: #{cbs_forward.2} parent=27 // pred_check
        _
      $region30: #{cbs_forward.2} parent=27 // pred_check_branch
        %240 = sbr.rel (%p237) target = $region32
      $region31: #{cbs_forward.2} parent=27 // pred_region
        %vm241 = vcmask 15360
        %242 = vst.msk [vmem:[#allocation2] sm:$0xff] %vm241, 0.0
        %243 = vst.msk [vmem:[#allocation2 + $0x8] sm:$0xff] %vm241, 0.0
      $region32: #{cbs_forward.2} parent=27 // pred_fallthru
        _
      %v244 = vld [vmem:[%s0] sm:$0xf]
      %v245 = vld [vmem:[%s0 + $0x4] sm:$0xf]
      %v246 = vld [vmem:[%s217] sm:$0xf]
      %v247 = vld [vmem:[%s217 + $0x4] sm:$0xf]
      %v250 = vunpack.c.l.b16 %v244
      %v251 = vunpack.c.l.b16 %v245
      %v252 = vpack.c.b16 %v251, %v250
      %v255 = vunpack.c.l.b16 %v246
      %v256 = vunpack.c.l.b16 %v247
      %v257 = vpack.c.b16 %v256, %v255
      %vm259 = vcmask 130048
      %v261 = vsel %vm259, %v252, 0
      %263 = vmatprep.subr.bf16.mxu0 0
      %264 = vmatpush1.bf16.msra.mxu0 %v257
      %265 = vmatprep.subr.bf16.mxu0 0
      %266 = vmatpush1.bf16.msra.mxu0 0
      %267 = vmatprep.subr.bf16.mxu0 0
      %268 = vmatpush1.bf16.msra.mxu0 0
      %269 = vmatprep.subr.bf16.mxu0 0
      %270 = vmatpush1.bf16.msra.mxu0 0
      %271 = vmatprep.subr.bf16.mxu0 0
      %272 = vmatpush1.bf16.msra.mxu0 0
      %273 = vmatprep.subr.bf16.mxu0 0
      %274 = vmatpush1.bf16.msra.mxu0 0
      %275 = vmatprep.subr.bf16.mxu0 0
      %276 = vmatpush1.bf16.msra.mxu0 0
      %277 = vmatprep.subr.bf16.mxu0 0
      %278 = vmatpush1.bf16.msra.mxu0 0
      %279 = vmatprep.subr.bf16.mxu0 0
      %280 = vmatpush1.bf16.msra.mxu0 0
      %281 = vmatprep.subr.bf16.mxu0 0
      %282 = vmatpush1.bf16.msra.mxu0 0
      %283 = vmatprep.subr.bf16.mxu0 0
      %284 = vmatpush1.bf16.msra.mxu0 0
      %285 = vmatprep.subr.bf16.mxu0 0
      %286 = vmatpush1.bf16.msra.mxu0 0
      %287 = vmatprep.subr.bf16.mxu0 0
      %288 = vmatpush1.bf16.msra.mxu0 0
      %289 = vmatprep.subr.bf16.mxu0 0
      %290 = vmatpush1.bf16.msra.mxu0 0
      %291 = vmatprep.subr.bf16.mxu0 0
      %292 = vmatpush1.bf16.msra.mxu0 0
      %293 = vmatprep.subr.bf16.mxu0 0
      %294 = vmatpush1.bf16.msra.mxu0 0
      %295 = vmatprep.mubr.bf16.mxu0 0
      %296 = vmatmul.mubr.bf16.gmra.mrb[0].mxu0 %v261
      %v297 = vpop.f32.mrb[0].mxu0
      %v298 = vadd.f32 0.0, %v297
      %v299 = vpop.f32.mrb[0].mxu0
      %v300 = vpop.f32.mrb[0].mxu0
      %v301 = vadd.f32 0.0, %v300
      %v302 = vpop.f32.mrb[0].mxu0
      %303 = vdwg.mxu0
      %v304 = vpack.c.bf16 %v301, %v298
      %v306 = vunpack.c.l.b16 %v304
      %v307 = vunpack.c.h.b16 %v304
      %v308 = vpack.c.b16 %v306, %v306
      %v309 = vpack.c.b16 %v307, %v307
      %312 = vst [vmem:[%s227] sm:$0xf] %v308
      %313 = vst [vmem:[%s227 + $0x4] sm:$0xf] %v309
      %314 = vadd.xlane.f32.xlu0 %v298
      %v315 = vpop.xlane.xlu0 %314
      %316 = vadd.xlane.f32.xlu0 %v301
      %v317 = vpop.xlane.xlu0 %316
      %v318 = vmul.f32 %v298, %v298
      %v319 = vmul.f32 %v301, %v301
      %320 = vadd.xlane.f32.xlu0 %v318
      %v321 = vpop.xlane.xlu0 %320
      %322 = vadd.xlane.f32.xlu0 %v319
      %v323 = vpop.xlane.xlu0 %322
      %vm324 = vcmask 7168
      %v325 = vsel %vm324, %v315, %v321
      %v326 = vsel %vm324, %v317, %v323
      %v327 = vld [vmem:[#allocation2] sm:$0xff]
      %v328 = vld [vmem:[#allocation2 + $0x8] sm:$0xff]
      %v329 = vadd.f32 %v327, %v325
      %v330 = vadd.f32 %v328, %v326
      %vm331 = vcmask 15360
      %332 = vst.msk [vmem:[#allocation2] sm:$0xff] %vm331, %v329
      %333 = vst.msk [vmem:[#allocation2 + $0x8] sm:$0xff] %vm331, %v330
      %p334 = scmp.eq.s32.totalorder %s21, 1
      %p335 = pnand %p334, %p236
      %p336 = pneg %p335
      // Predicated region
      $region33: #{cbs_forward.2} parent=27 // pred_check
        _
      $region34: #{cbs_forward.2} parent=27 // pred_check_branch
        %338 = sbr.rel (%p335) target = $region36
      $region35: #{cbs_forward.2} parent=27 // pred_region
        %v339 = vld [vmem:[#allocation2] sm:$0xff]
        %v340 = vld [vmem:[#allocation2 + $0x8] sm:$0xff]
        %341 = vst.msk [vmem:[%s233] sm:$0xff] %vm331, %v339
        %342 = vst.msk [vmem:[%s233 + $0x8] sm:$0xff] %vm331, %v340
      $region36: #{cbs_forward.2} parent=27 // pred_fallthru
        _
      %s343 = sadd.s32 %s20, %s22
      %p344 = scmp.lt.s32.totalorder %s21, 1
      %s345 = scalar_select %p344, %s21, 1
      %p346 = scmp.lt.s32.totalorder %s343, 0
      %s347 = scalar_select %p346, %s343, 0
      %s348 = smul.addr %s345, 2
      %s349 = sadd.s32 %s347, %s348
      %s350 = smul.addr %s349, 4
      %s351 = scalar_lea.vmem %s2, %s350
      %p352 = scmp.lt.s32.totalorder %s20, 0
      %s353 = scalar_select %p352, %s20, 0
      %s354 = smul.addr %s353, 2
      %s355 = smul.addr %s354, 8
      %s356 = scalar_lea.vmem %s3, %s355
      // Predicated region
      $region37: #{cbs_forward.2} parent=27 // pred_check
        %p357 = pneg %p107
      $region38: #{cbs_forward.2} parent=27 // pred_check_branch
        %359 = sbr.rel (%p357) target = $region40
      $region39: #{cbs_forward.2} parent=27 // pred_region
        %s360 = sadd.s32 %s20, %s22
      $region40: #{cbs_forward.2} parent=27 // pred_fallthru
        _
      // Predicated region
      $region41: #{cbs_forward.2} parent=27 // pred_check
        %p361 = pneg %p133
      $region42: #{cbs_forward.2} parent=27 // pred_check_branch
        %363 = sbr.rel (%p361) target = $region44
      $region43: #{cbs_forward.2} parent=27 // pred_region
        _
      $region44: #{cbs_forward.2} parent=27 // pred_fallthru
        _
      // Predicated region
      $region45: #{cbs_forward.2} parent=27 // pred_check
        %p364 = pneg %p133
      $region46: #{cbs_forward.2} parent=27 // pred_check_branch
        %366 = sbr.rel (%p364) target = $region48
      $region47: #{cbs_forward.2} parent=27 // pred_region
        %p367 = scmp.lt.s32.totalorder %s20, 0
        %s368 = scalar_select %p367, %s20, 0
        %s369 = smul.addr %s368, 2
        %s370 = smul.addr %s369, 8
        %s371 = scalar_lea.vmem %s3, %s370
      $region48: #{cbs_forward.2} parent=27 // pred_fallthru
        _
    $region28: #{cbs_forward.2} parent=5 // pred_fallthru
      _
    %p372 = scmp.le.s32.totalorder 2, %s10
    // Predicated region
    $region49: #{cbs_forward.2} parent=5 // pred_check
      %p373 = pneg %p372
    $region50: #{cbs_forward.2} parent=5 // pred_check_branch
      %375 = sbr.rel (%p373) target = $region52
    $region51: #{cbs_forward.2} parent=5 // pred_region
      %s376 = ssub.s32 %s10, 2
      // Predicated region
      $region53: #{cbs_forward.2} parent=51 // pred_check
        %p377 = pneg %p113
      $region54: #{cbs_forward.2} parent=51 // pred_check_branch
        %379 = sbr.rel (%p377) target = $region56
      $region55: #{cbs_forward.2} parent=51 // pred_region
        %s380 = sadd.s32 %s23, %s25
        %p381 = scmp.lt.s32.totalorder %s24, 1
        %s382 = scalar_select %p381, %s24, 1
        %p383 = scmp.lt.s32.totalorder %s380, 0
        %s384 = scalar_select %p383, %s380, 0
        %s385 = smul.addr %s382, 2
        %s386 = sadd.s32 %s384, %s385
        %s387 = smul.addr %s386, 4
        %s388 = scalar_lea.vmem %s2, %s387
      $region56: #{cbs_forward.2} parent=51 // pred_fallthru
        _
    $region52: #{cbs_forward.2} parent=5 // pred_fallthru
      _
  $region6: #{cbs_forward.2} parent=0 // loop_footer
    %s14 = sadd.s32 1, %s10
  $region7: #{cbs_forward.2} parent=0 // loop_footer_branch
    %9 = sbr.rel target = $region3
  $region8: #{cbs_forward.2} parent=0 // loop_exit
    _

</llo_original>
